<compile_context>
chip_gen: v6e
topology: v6e:2x2x1
jax: 0.10.0
libtpu: 0.0.40
codegen_flags: <defaults>
</compile_context>

<pallas_src>
import functools

import numpy as np
import jax
import jax.numpy as jnp
from jax.experimental import pallas as pl
from jax.experimental.pallas import tpu as pltpu


# ---------------------------------------------------------------------------
# PE table (matches the PyTorch __init__: numpy math, then cast)
# ---------------------------------------------------------------------------

def make_pe_table(dim_model, max_seq_len=5000, dtype=jnp.float32):
    i = np.arange(dim_model)
    pos = np.arange(max_seq_len)
    pe = pos[:, None] / np.power(10000.0, 2.0 * i / dim_model)[None, :]
    pe[:, 0::2] = np.sin(pe[:, 0::2])
    pe[:, 1::2] = np.cos(pe[:, 1::2])
    return jnp.asarray(pe, dtype=dtype)


# ---------------------------------------------------------------------------
# Kernels
# ---------------------------------------------------------------------------

def _pe_flat_kernel(minmax_ref, len_ref, x_ref, pe_ref, o_ref, *, tile_f, dim):
    """Lane-dense path: x/o blocks are (B, tile_f) slices of the (B, S*D) view,
    pe block is (1, tile_f) from the flattened table."""
    start = pl.program_id(0) * tile_f
    min_elems = minmax_ref[0] * dim          # SMEM scalars
    max_elems = minmax_ref[1] * dim
    all_valid = start + tile_f <= min_elems
    none_valid = start >= max_elems

    @pl.when(all_valid)
    def _():                                  # every row fully inside its length
        o_ref[...] = x_ref[...] + pe_ref[...].astype(o_ref.dtype)

    @pl.when(none_valid)
    def _():                                  # every row past its length
        o_ref[...] = x_ref[...]

    @pl.when(jnp.logical_not(jnp.logical_or(all_valid, none_valid)))
    def _():                                  # boundary tile: per-row mask
        flat = start + jax.lax.broadcasted_iota(jnp.int32, (1, tile_f), 1)
        valid = flat < len_ref[...] * dim                       # (B, tile_f)
        pe = pe_ref[...].astype(o_ref.dtype)                    # (1, tile_f)
        o_ref[...] = x_ref[...] + jnp.where(valid, pe, 0.0)


def _pe_3d_kernel(minmax_ref, len_ref, x_ref, pe_ref, o_ref, *, tile_s):
    """Fallback path when S*D is not a multiple of 128: (B, tile_s, D) blocks."""
    start = pl.program_id(0) * tile_s
    all_valid = start + tile_s <= minmax_ref[0]
    none_valid = start >= minmax_ref[1]

    @pl.when(all_valid)
    def _():
        o_ref[...] = x_ref[...] + pe_ref[...].astype(o_ref.dtype)

    @pl.when(none_valid)
    def _():
        o_ref[...] = x_ref[...]

    @pl.when(jnp.logical_not(jnp.logical_or(all_valid, none_valid)))
    def _():
        pos = start + jax.lax.broadcasted_iota(jnp.int32, (1, tile_s, 1), 1)
        valid = pos < len_ref[...][:, :, None]                  # (B, tile_s, 1)
        pe = pe_ref[...].astype(o_ref.dtype)                    # (tile_s, D)
        o_ref[...] = x_ref[...] + jnp.where(valid, pe, 0.0)


# ---------------------------------------------------------------------------
# Tile selection (byte-targeted, no full-length fallback for divisible shapes)
# ---------------------------------------------------------------------------

def _pick_tile(total, unit, max_elems):
    """Largest multiple of `unit` dividing `total` that is <= max_elems.
    Returns `total` itself if it already fits; falls back to `unit`."""
    if total <= max_elems:
        return total
    t = (max_elems // unit) * unit
    while t >= unit:
        if total % t == 0:
            return t
        t -= unit
    return unit


# ---------------------------------------------------------------------------
# Wrapper
# ---------------------------------------------------------------------------

def positional_encoding(x, x_len, pe_table, *, target_block_bytes=2 << 20):
    """x: (B, S, D); x_len: (B,) or (B, 1) ints; pe_table: (>=S, D)."""
    B, S, D = x.shape
    assert pe_table.shape[0] >= S and pe_table.shape[1] == D
    dtype = x.dtype
    ebytes = jnp.dtype(dtype).itemsize
    pe_ebytes = jnp.dtype(pe_table.dtype).itemsize

    x_len = jnp.asarray(x_len).reshape(B).astype(jnp.int32)
    lens2d = x_len.reshape(B, 1)                                # tiny VMEM input
    minmax = jnp.stack([jnp.min(x_len), jnp.max(x_len)])        # SMEM prefetch

    if (S * D) % 128 == 0:
        # Lane-dense flat path: last dim of every block is a multiple of 128.
        F = S * D
        max_tile = max(128, target_block_bytes // (ebytes * B))
        tile_f = _pick_tile(F, 128, max_tile)
        grid = (F // tile_f,)
        x_in = x.reshape(B, F)                                  # free reshape
        pe_in = pe_table.reshape(1, -1)                         # full table, free reshape
        kernel = functools.partial(_pe_flat_kernel, tile_f=tile_f, dim=D)
        in_specs = [
            pl.BlockSpec((B, 1), lambda t, mm: (0, 0)),         # lens
            pl.BlockSpec((B, tile_f), lambda t, mm: (0, t)),    # x
            pl.BlockSpec((1, tile_f), lambda t, mm: (0, t)),    # pe
        ]
        out_specs = pl.BlockSpec((B, tile_f), lambda t, mm: (0, t))
        out_shape = jax.ShapeDtypeStruct((B, F), dtype)
        x_block_bytes = B * tile_f * ebytes
        pe_block_bytes = tile_f * pe_ebytes
    else:
        # Fallback 3-D path (D stays the full-width last dim; masked stores if
        # D % 128 != 0, but always compiles).
        if S % 8 == 0:
            max_tile_s = max(8, target_block_bytes // (ebytes * B * D))
            tile_s = _pick_tile(S, 8, max_tile_s)
            pe_in = pe_table                                    # full table, no slice copy
        else:
            # TODO(synk): S not a multiple of 8 -> single full-S block; pe must be
            # sliced so the block equals its full dims. Only sensible for small S.
            tile_s = S
            pe_in = pe_table[:S]
        grid = (S // tile_s,)
        x_in = x
        kernel = functools.partial(_pe_3d_kernel, tile_s=tile_s)
        in_specs = [
            pl.BlockSpec((B, 1), lambda t, mm: (0, 0)),
            pl.BlockSpec((B, tile_s, D), lambda t, mm: (0, t, 0)),
            pl.BlockSpec((tile_s, D), lambda t, mm: (t, 0)),
        ]
        out_specs = pl.BlockSpec((B, tile_s, D), lambda t, mm: (0, t, 0))
        out_shape = jax.ShapeDtypeStruct((B, S, D), dtype)
        x_block_bytes = B * tile_s * D * ebytes
        pe_block_bytes = tile_s * D * pe_ebytes

    # Per-step VMEM footprint: double-buffered x-in, out and pe blocks, plus an
    # allowance for iota/mask/select temporaries on boundary tiles.
    footprint = 4 * x_block_bytes + 2 * pe_block_bytes + 3 * x_block_bytes
    vmem_limit = int(min(max(2 * footprint, 16 << 20), 56 << 20))

    out = pl.pallas_call(
        kernel,
        out_shape=out_shape,
        grid_spec=pltpu.PrefetchScalarGridSpec(
            num_scalar_prefetch=1,
            grid=grid,
            in_specs=in_specs,
            out_specs=out_specs,
        ),
        compiler_params=pltpu.CompilerParams(
            dimension_semantics=("parallel",),
            vmem_limit_bytes=vmem_limit),
        # NOTE: add input_output_aliases={2: 0} when the caller can donate x
        # (halves the op's HBM footprint; in-kernel traffic unchanged).
    )(minmax, lens2d, x_in, pe_in)

    return out.reshape(B, S, D)


# ---------------------------------------------------------------------------

def _ref(x, x_len, pe_table):
    B, S, D = x.shape
    keep = jnp.arange(S)[None, :] < jnp.asarray(x_len).reshape(B, 1)
    return x + jnp.where(keep[:, :, None], pe_table[:S][None, :, :], 0.0).astype(x.dtype)


if __name__ == "__main__":
    # TODO(synk): nn.Dropout(0.1) is skipped — forward is exercised with
    # dropout=False (identity), matching inference semantics.
    key = jax.random.PRNGKey(0)
    k1, k2, k3 = jax.random.split(key, 3)

    # Case 1: lane-dense flat path (S*D % 128 == 0), module-default pe table.
    B, S, D = 2, 8, 32
    x = jax.random.normal(k1, (B, S, D), jnp.float32)
    x_len = jnp.array([[8], [6]], dtype=jnp.int32)              # (B, 1) as in the spec
    pe = make_pe_table(D, max_seq_len=5000)
    out = jax.block_until_ready(positional_encoding(x, x_len, pe))
    assert out.shape == (B, S, D)
    assert bool(jnp.isfinite(out).all())
    assert bool(jnp.allclose(out, _ref(x, x_len, pe), atol=1e-6, rtol=1e-6))

    # Case 2: multi-tile flat path exercising the all-valid / boundary /
    # all-invalid fast paths (small block target forces 4 sequence tiles).
    B, S, D = 2, 64, 64
    x = jax.random.normal(k2, (B, S, D), jnp.float32)
    x_len = jnp.array([[32], [16]], dtype=jnp.int32)
    pe = make_pe_table(D, max_seq_len=128)
    out = jax.block_until_ready(
        positional_encoding(x, x_len, pe, target_block_bytes=8 * 1024))
    assert bool(jnp.allclose(out, _ref(x, x_len, pe), atol=1e-6, rtol=1e-6))

    # Case 3: fallback 3-D path (S*D % 128 != 0).
    B, S, D = 2, 8, 36
    x = jax.random.normal(k3, (B, S, D), jnp.float32)
    x_len = jnp.array([[8], [5]], dtype=jnp.int32)
    pe = make_pe_table(D, max_seq_len=64)
    out = jax.block_until_ready(positional_encoding(x, x_len, pe))
    assert bool(jnp.allclose(out, _ref(x, x_len, pe), atol=1e-6, rtol=1e-6))

    print("KERNEL_OK")
</pallas_src>

<mosaic_0001>
module attributes {stable_mosaic.version = 11 : i64} {
  func.func @_pe_flat_kernel(%arg0: i32, %arg1: memref<2xi32, #tpu.memory_space<smem>>, %arg2: memref<2x1xi32, #tpu.memory_space<vmem>>, %arg3: memref<2x256xf32, #tpu.memory_space<vmem>>, %arg4: memref<1x256xf32, #tpu.memory_space<vmem>>, %arg5: memref<2x256xf32, #tpu.memory_space<vmem>>) attributes {dimension_semantics = [#tpu.dimension_semantics<parallel>], iteration_bounds = array<i64: 1>, scalar_prefetch = 1 : i64, scratch_operands = 0 : i64, tpu.core_type = #tpu.core_type<tc>, window_params = [{pipeline_mode = #tpu.pipeline_mode<synchronous>, transform_indices = @transform_0, window_bounds = array<i64: 2, 1>}, {transform_indices = @transform_1, window_bounds = array<i64: 2, 256>}, {transform_indices = @transform_2, window_bounds = array<i64: 1, 256>}, {transform_indices = @transform_3, window_bounds = array<i64: 2, 256>}]} {
    %c256_i32 = arith.constant 256 : i32
    %0 = arith.muli %arg0, %c256_i32 : i32
    %c0 = arith.constant 0 : index
    %1 = memref.load %arg1[%c0] : memref<2xi32, #tpu.memory_space<smem>>
    %c32_i32 = arith.constant 32 : i32
    %2 = arith.muli %1, %c32_i32 : i32
    %c1 = arith.constant 1 : index
    %3 = memref.load %arg1[%c1] : memref<2xi32, #tpu.memory_space<smem>>
    %c32_i32_0 = arith.constant 32 : i32
    %4 = arith.muli %3, %c32_i32_0 : i32
    %c256_i32_1 = arith.constant 256 : i32
    %5 = arith.addi %0, %c256_i32_1 : i32
    %6 = arith.cmpi sle, %5, %2 : i32
    %7 = arith.cmpi sge, %0, %4 : i32
    %8 = arith.extui %6 : i1 to i32
    %c0_i32 = arith.constant 0 : i32
    %9 = arith.cmpi ne, %8, %c0_i32 : i32
    scf.if %9 {
      %c0_4 = arith.constant 0 : index
      %c0_5 = arith.constant 0 : index
      %16 = vector.load %arg3[%c0_4, %c0_5] : memref<2x256xf32, #tpu.memory_space<vmem>>, vector<2x256xf32>
      %c0_6 = arith.constant 0 : index
      %c0_7 = arith.constant 0 : index
      %17 = vector.load %arg4[%c0_6, %c0_7] : memref<1x256xf32, #tpu.memory_space<vmem>>, vector<1x256xf32>
      %18 = vector.broadcast %17 : vector<1x256xf32> to vector<2x256xf32>
      %19 = arith.addf %16, %18 : vector<2x256xf32>
      %c0_8 = arith.constant 0 : index
      %c0_9 = arith.constant 0 : index
      %20 = vector.load %arg5[%c0_8, %c0_9] : memref<2x256xf32, #tpu.memory_space<vmem>>, vector<2x256xf32>
      tpu.vector_store %arg5[%c0_8, %c0_9], %19 {strides = array<i32>} : memref<2x256xf32, #tpu.memory_space<vmem>>, vector<2x256xf32>,
    } else {
    }
    %10 = arith.extui %7 : i1 to i32
    %c0_i32_2 = arith.constant 0 : i32
    %11 = arith.cmpi ne, %10, %c0_i32_2 : i32
    scf.if %11 {
      %c0_4 = arith.constant 0 : index
      %c0_5 = arith.constant 0 : index
      %16 = vector.load %arg3[%c0_4, %c0_5] : memref<2x256xf32, #tpu.memory_space<vmem>>, vector<2x256xf32>
      %c0_6 = arith.constant 0 : index
      %c0_7 = arith.constant 0 : index
      %17 = vector.load %arg5[%c0_6, %c0_7] : memref<2x256xf32, #tpu.memory_space<vmem>>, vector<2x256xf32>
      tpu.vector_store %arg5[%c0_6, %c0_7], %16 {strides = array<i32>} : memref<2x256xf32, #tpu.memory_space<vmem>>, vector<2x256xf32>,
    } else {
    }
    %12 = arith.ori %6, %7 : i1
    %true = arith.constant true
    %13 = arith.xori %12, %true : i1
    %14 = arith.extui %13 : i1 to i32
    %c0_i32_3 = arith.constant 0 : i32
    %15 = arith.cmpi ne, %14, %c0_i32_3 : i32
    scf.if %15 {
      %16 = tpu.iota {dimensions = array<i32: 1>} : vector<1x256xi32>
      %17 = vector.broadcast %0 : i32 to vector<1x256xi32>
      %18 = arith.addi %17, %16 : vector<1x256xi32>
      %c0_4 = arith.constant 0 : index
      %c0_5 = arith.constant 0 : index
      %19 = vector.load %arg2[%c0_4, %c0_5] : memref<2x1xi32, #tpu.memory_space<vmem>>, vector<2x1xi32>
      %c32_i32_6 = arith.constant 32 : i32
      %20 = vector.broadcast %c32_i32_6 : i32 to vector<2x1xi32>
      %21 = arith.muli %19, %20 : vector<2x1xi32>
      %22 = vector.broadcast %18 : vector<1x256xi32> to vector<2x256xi32>
      %23 = vector.broadcast %21 : vector<2x1xi32> to vector<2x256xi32>
      %24 = arith.cmpi slt, %22, %23 : vector<2x256xi32>
      %c0_7 = arith.constant 0 : index
      %c0_8 = arith.constant 0 : index
      %25 = vector.load %arg4[%c0_7, %c0_8] : memref<1x256xf32, #tpu.memory_space<vmem>>, vector<1x256xf32>
      %c0_9 = arith.constant 0 : index
      %c0_10 = arith.constant 0 : index
      %26 = vector.load %arg3[%c0_9, %c0_10] : memref<2x256xf32, #tpu.memory_space<vmem>>, vector<2x256xf32>
      %cst = arith.constant 0.000000e+00 : f32
      %27 = vector.shape_cast %25 : vector<1x256xf32> to vector<1x256xf32>
      %28 = vector.broadcast %27 : vector<1x256xf32> to vector<2x256xf32>
      %29 = vector.broadcast %cst : f32 to vector<2x256xf32>
      %30 = arith.select %24, %28, %29 : vector<2x256xi1>, vector<2x256xf32>
      %31 = arith.addf %26, %30 : vector<2x256xf32>
      %c0_11 = arith.constant 0 : index
      %c0_12 = arith.constant 0 : index
      %32 = vector.load %arg5[%c0_11, %c0_12] : memref<2x256xf32, #tpu.memory_space<vmem>>, vector<2x256xf32>
      tpu.vector_store %arg5[%c0_11, %c0_12], %31 {strides = array<i32>} : memref<2x256xf32, #tpu.memory_space<vmem>>, vector<2x256xf32>,
    } else {
    }
    return
  }
  func.func @transform_0(%arg0: i32, %arg1: memref<2xi32, #tpu.memory_space<smem>>) -> (i32, i32) {
    %c0_i32 = arith.constant 0 : i32
    %c0_i32_0 = arith.constant 0 : i32
    %c0_i32_1 = arith.constant 0 : i32
    return %c0_i32, %c0_i32_0 : i32, i32
  }
  func.func @transform_1(%arg0: i32, %arg1: memref<2xi32, #tpu.memory_space<smem>>) -> (i32, i32) {
    %c0_i32 = arith.constant 0 : i32
    %c0_i32_0 = arith.constant 0 : i32
    return %c0_i32, %arg0 : i32, i32
  }
  func.func @transform_2(%arg0: i32, %arg1: memref<2xi32, #tpu.memory_space<smem>>) -> (i32, i32) {
    %c0_i32 = arith.constant 0 : i32
    %c0_i32_0 = arith.constant 0 : i32
    return %c0_i32, %arg0 : i32, i32
  }
  func.func @transform_3(%arg0: i32, %arg1: memref<2xi32, #tpu.memory_space<smem>>) -> (i32, i32) {
    %c0_i32 = arith.constant 0 : i32
    %c0_i32_0 = arith.constant 0 : i32
    return %c0_i32, %arg0 : i32, i32
  }
}

</mosaic_0001>

<llo_original>
// kernel: tpu_custom_call.1
$region0: #{tpu_custom_call.1}
  #allocation0 [shape = 'u32[]', space=smem, size = 0x4, offset = 0x4, fixed_abs, tag = 'smem constant byte address 0x4 - core index']
  #allocation1 [shape = 'u32[144,128]{1,0:T(1,128)}', space=vmem, size = 0x12000, scoped, tag = 'internal scratch']
  #allocation2 [shape = 's32[1]{0}', space=sflag, size = 0x4, scoped, tag = 'scoped memory for tpu_custom_call.1']
  #allocation3 [shape = 'u8[512]{0}', space=smem, size = 0x200, scoped, tag = 'prefetched SMEM operand 0']
  %s0 = inlined_call_operand.vmem [shape: s32[2], index: 0, kind: input, shape index: {}]
  %s1 = inlined_call_operand.vmem [shape: s32[2,1], index: 1, kind: input, shape index: {}]
  %s2 = inlined_call_operand.vmem [shape: f32[2,256], index: 2, kind: input, shape index: {}]
  %s3 = inlined_call_operand.hbm [shape: f32[1,160000], index: 3, kind: input, shape index: {}]
  %s4 = inlined_call_operand.hbm [shape: f32[2,256], index: 4, kind: output, shape index: {}]
  %s5 = sld [smem:[#allocation0]]
  $region38: #{tpu_custom_call.1} parent=0
    _
  %s7 = ssub.s32 1, %s5
  %s8 = scalar_select 0, %s7, %s5
  %s9 = sshll.u32 %s0, 4
  %s10 = int_to_ptr.vmem [resolvable:$true] %s9
  %12 = dma.vmem_to_smem %s10, 16, [#allocation3], [#allocation2]
  %13 = dma.done [#allocation2], 16
  %14 = sfence
  $region1: #{tpu_custom_call.1} parent=0
    #allocation4 [shape = 'u8[1024]{0}', space=vmem, size = 0x400, scoped, tag = 'input window, operand 3, single buffered']
    #allocation5 [shape = 's32[1]{0}', space=sflag, size = 0x4, scoped, tag = 'scoped memory for tpu_custom_call.1']
    #allocation6 [shape = 's32[1]{0}', space=sflag, size = 0x4, scoped, tag = 'scoped memory for tpu_custom_call.1']
    #allocation7 [shape = 'u8[2048]{0}', space=vmem, size = 0x800, scoped, tag = 'output window, operand 0, single buffered']
    %15 = vsyncpa [#allocation5], 0
    %16 = vsyncpa [#allocation6], 0
    // Predicated region
    $region2: #{tpu_custom_call.1} parent=1 // pred_check
      _
    $region3: #{tpu_custom_call.1} parent=1 // pred_check_branch
      %18 = sbr.rel (0) target = $region5
    $region4: #{tpu_custom_call.1} parent=1 // pred_region
      _
    $region5: #{tpu_custom_call.1} parent=1 // pred_fallthru
      _
    // Predicated region
    $region6: #{tpu_custom_call.1} parent=1 // pred_check
      _
    $region7: #{tpu_custom_call.1} parent=1 // pred_check_branch
      %20 = sbr.rel (0) target = $region9
    $region8: #{tpu_custom_call.1} parent=1 // pred_region
      _
    $region9: #{tpu_custom_call.1} parent=1 // pred_fallthru
      _
    // Predicated region
    $region10: #{tpu_custom_call.1} parent=1 // pred_check
      _
    $region11: #{tpu_custom_call.1} parent=1 // pred_check_branch
      %22 = sbr.rel (0) target = $region13
    $region12: #{tpu_custom_call.1} parent=1 // pred_region
      %s24 = ssub.s32 32, 32
      %25 = vsyncadd [#allocation5], %s24
      %s27 = sshll.u32 [#allocation4], 4
      %s28 = int_to_ptr.vmem [resolvable:$true] %s27
      %30 = dma.hbm_to_vmem [thread:$0]  %s3, 32, %s28, [#allocation5]
    $region13: #{tpu_custom_call.1} parent=1 // pred_fallthru
      _
    // Predicated region
    $region14: #{tpu_custom_call.1} parent=1 // pred_check
      _
    $region15: #{tpu_custom_call.1} parent=1 // pred_check_branch
      %32 = sbr.rel (0) target = $region17
    $region16: #{tpu_custom_call.1} parent=1 // pred_region
      %33 = dma.done [#allocation5], 32
    $region17: #{tpu_custom_call.1} parent=1 // pred_fallthru
      _
    %s34 = smul.u32 0, 256
    %s35 = sld [smem:[#allocation3]]
    %s36 = smul.u32 %s35, 32
    %s37 = sld [smem:[#allocation3 + $0x1]]
    %s38 = smul.u32 %s37, 32
    %s39 = sadd.s32 %s34, 256
    %p40 = scmp.le.s32.totalorder %s39, %s36
    %p41 = scmp.ge.s32.totalorder %s34, %s38
    // Predicated region
    $region18: #{tpu_custom_call.1} parent=1 // pred_check
      %p42 = pneg %p40
    $region19: #{tpu_custom_call.1} parent=1 // pred_check_branch
      %44 = sbr.rel (%p42) target = $region21
    $region20: #{tpu_custom_call.1} parent=1 // pred_region
      %v45 = vld [vmem:[%s2] sm:$0xf]
      %v46 = vld [vmem:[#allocation4] sm:$0x3]
      %v48 = vlaneseq
      %v49 = vshrl.u32 %v48, 7
      %v50 = vsub.s32 0, %v49
      %v51 = vrot.slane %v46, %v50
      %v52 = vlaneseq
      %v53 = vshrl.u32 %v52, 7
      %v54 = vsub.s32 1, %v53
      %v55 = vrot.slane %v46, %v54
      %v56 = vcombine.low %v51, %v55
      %v58 = vunpack.c.l.s4 1983009808
      %v59 = vunpack.c.0.s8 %v58
      %v60 = vlaneseq
      %v61 = vshrl.u32 %v60, 7
      %v62 = vsub.s32 %v59, %v61
      %v63 = vrot.slane %v56, %v62
      %v65 = vadd.f32 %v45, %v63
      %66 = vst [vmem:[#allocation7] sm:$0xf] %v65
    $region21: #{tpu_custom_call.1} parent=1 // pred_fallthru
      _
    // Predicated region
    $region22: #{tpu_custom_call.1} parent=1 // pred_check
      %p67 = pneg %p41
    $region23: #{tpu_custom_call.1} parent=1 // pred_check_branch
      %69 = sbr.rel (%p67) target = $region25
    $region24: #{tpu_custom_call.1} parent=1 // pred_region
      %v70 = vld [vmem:[%s2] sm:$0xf]
      %71 = vst [vmem:[#allocation7] sm:$0xf] %v70
    $region25: #{tpu_custom_call.1} parent=1 // pred_fallthru
      _
    %p72 = por %p40, %p41
    %p73 = pneg %p72
    // Predicated region
    $region26: #{tpu_custom_call.1} parent=1 // pred_check
      _
    $region27: #{tpu_custom_call.1} parent=1 // pred_check_branch
      %75 = sbr.rel (%p72) target = $region29
    $region28: #{tpu_custom_call.1} parent=1 // pred_region
      %v76 = vlaneseq
      %v77 = vand.u32 %v76, 127
      %v78 = vadd.s32 %v77, 128
      %v79 = vstv %s34
      %v80 = vadd.s32 %v79, %v77
      %v81 = vadd.s32 %v79, %v78
      %v82 = vld [vmem:[%s1] sm:$0x3]
      %v83 = vmul.u32 %v82, 32
      %84 = vset.pattern.permute.xlu0 0
      %85 = vperm.xlu0 %84, %v83
      %v86 = vpop.permute.xlu0 %85
      %vm87 = vcmp.lt.s32.totalorder %v80, %v86
      %vm88 = vcmp.lt.s32.totalorder %v81, %v86
      %v89 = vld [vmem:[#allocation4] sm:$0x3]
      %v90 = vld [vmem:[%s2] sm:$0xf]
      %v92 = vlaneseq
      %v93 = vshrl.u32 %v92, 7
      %v94 = vsub.s32 0, %v93
      %v95 = vrot.slane %v89, %v94
      %v96 = vlaneseq
      %v97 = vshrl.u32 %v96, 7
      %v98 = vsub.s32 1, %v97
      %v99 = vrot.slane %v89, %v98
      %v102 = vsel %vm87, %v95, 0.0
      %v103 = vsel %vm88, %v99, 0.0
      %v106 = vcombine.low %v102, %v103
      %v108 = vunpack.c.l.s4 1983009808
      %v109 = vunpack.c.0.s8 %v108
      %v110 = vlaneseq
      %v111 = vshrl.u32 %v110, 7
      %v112 = vsub.s32 %v109, %v111
      %v113 = vrot.slane %v106, %v112
      %v115 = vadd.f32 %v90, %v113
      %116 = vst [vmem:[#allocation7] sm:$0xf] %v115
    $region29: #{tpu_custom_call.1} parent=1 // pred_fallthru
      _
    // Predicated region
    $region30: #{tpu_custom_call.1} parent=1 // pred_check
      _
    $region31: #{tpu_custom_call.1} parent=1 // pred_check_branch
      %118 = sbr.rel (0) target = $region33
    $region32: #{tpu_custom_call.1} parent=1 // pred_region
      %s120 = ssub.s32 64, 64
      %121 = vsyncadd [#allocation6], %s120
      %s123 = sshll.u32 [#allocation7], 4
      %s124 = int_to_ptr.vmem [resolvable:$true] %s123
      %126 = dma.vmem_to_hbm [thread:$0]  %s124, 64, %s4, [#allocation6]
    $region33: #{tpu_custom_call.1} parent=1 // pred_fallthru
      _
    // Predicated region
    $region34: #{tpu_custom_call.1} parent=1 // pred_check
      _
    $region35: #{tpu_custom_call.1} parent=1 // pred_check_branch
      %128 = sbr.rel (0) target = $region37
    $region36: #{tpu_custom_call.1} parent=1 // pred_region
      %129 = dma.done [#allocation6], 64
    $region37: #{tpu_custom_call.1} parent=1 // pred_fallthru
      _
    %130 = vsyncpa [#allocation5], 1
    %131 = vsyncpa [#allocation6], 1

</llo_original>
